<compile_context>
chip_gen: v5e
topology: v5e:2x2
jax: 0.10.0
libtpu: 0.0.40
codegen_flags: <defaults>
</compile_context>

<pallas_src>
import functools
from typing import NamedTuple

import jax
import jax.numpy as jnp
from jax import lax
from jax.experimental import pallas as pl
from jax.experimental.pallas import tpu as pltpu


# ----------------------------- small helpers ------------------------------


def _round_up(x, m):
    return -(-x // m) * m


def _pad2(x, rows, cols):
    r, c = x.shape
    if r == rows and c == cols:
        return x
    return jnp.pad(x, ((0, rows - r), (0, cols - c)))


@functools.lru_cache(maxsize=None)
def _device_kind():
    try:
        return jax.devices()[0].device_kind.lower()
    except Exception:  # pragma: no cover - CPU fallback / interpret mode
        return ""


@functools.lru_cache(maxsize=None)
def _num_tensorcores():
    """TensorCores per device: 2 on v7x (and v4/v5p megacore), 1 on v5e/v6e."""
    kind = _device_kind()
    return 2 if any(t in kind for t in ("v7", "v4", "v5p")) else 1


@functools.lru_cache(maxsize=None)
def _vmem_capacity_bytes():
    try:
        cap = getattr(pltpu.get_tpu_info(), "vmem_capacity_bytes", None)
        if cap:
            return int(cap)
    except Exception:
        pass
    # Fallback by generation: v7x has 64 MiB per TensorCore, older have 128 MiB.
    return (64 if "v7" in _device_kind() else 128) * 2**20


def _vmem_limit_bytes(needed):
    cap = _vmem_capacity_bytes()
    want = max(32 * 2**20, int(1.25 * needed) + (2 << 20))
    return min(int(0.85 * cap), want)


def _default_tile_b(bp, num_cores):
    """Batch tile: split across TensorCores only on 2-TC chips; otherwise keep
    the full batch in one MXU M tile (cap at 256)."""
    tb = bp
    if (num_cores > 1 and bp >= 8 * num_cores and bp % num_cores == 0
            and (bp // num_cores) % 8 == 0):
        tb = bp // num_cores
    cap = 256
    if tb > cap:
        for cand in range(cap, 7, -8):
            if tb % cand == 0:
                tb = cand
                break
    return tb


def _pick_unroll(num_steps, tile_b, np_):
    """Partial-unroll factor for the rollout loop.

    Per unrolled step the live carry is ~3 f32 arrays of (tile_b, Np)
    (state, fired, s); keep the unrolled window well under the 256 KiB vreg
    file so the LLO scheduler can overlap adjacent steps without spilling.
    """
    if num_steps <= 1:
        return 1
    carry_bytes = 3 * tile_b * np_ * 4
    if num_steps <= 8 and carry_bytes <= 64 * 1024:
        return num_steps
    if carry_bytes <= 64 * 1024:
        return 4
    if carry_bytes <= 160 * 1024:
        return 2
    return 1


# ------------------------- parameter preconditioning ----------------------


class WormParams(NamedTuple):
    conn_t: jax.Array   # (Np, Np) pre-transposed connectome (zero-padded)
    clock: jax.Array    # (1, Np) f32 clock neuron (zero-padded)
    n: int              # true neuron count


def precondition_params(connectome, clock_neuron, *, weights_dtype=jnp.float32):
    """Pad / transpose / cast the parameters ONCE (hoist out of per-step calls).

    Padding MUST stay zero: padded (fake) neurons may "fire" (s = 0 >= thresh
    when thresh <= 0), but zero weight rows/cols keep them from contaminating
    real neurons across rollout steps.
    """
    connectome = jnp.asarray(connectome, jnp.float32)
    clock_neuron = jnp.asarray(clock_neuron, jnp.float32)
    n = connectome.shape[0]
    assert connectome.shape == (n, n)
    np_ = _round_up(n, 128)
    conn_t = _pad2(connectome.T, np_, np_).astype(weights_dtype)
    clock = _pad2(clock_neuron.reshape(1, n), 1, np_)
    return WormParams(conn_t=conn_t, clock=clock, n=n)


# -------------------------------- kernels ----------------------------------


def _linear_step(state, fired, conn_t, clock, thresh):
    """One sim_step on in-register values.

    conn_t is the pre-transposed weight (K_in, N_out): fired @ conn_t equals
    fired @ connectome.T, i.e. the canonical (B,K)x(K,N) MXU contraction, so no
    in-kernel transpose is ever emitted. fired is {0,1}, hence casting it to
    the (possibly bf16) weight dtype is exact; accumulation stays f32.
    """
    s = (state
         + lax.dot_general(fired.astype(conn_t.dtype), conn_t,
                           (((1,), (0,)), ((), ())),
                           preferred_element_type=jnp.float32)
         + clock)
    f = (s >= thresh).astype(jnp.float32)     # SimpleStep.forward
    new_state = s * (1.0 - f)                 # bit-faithful to the module
    return new_state, f


def _worm_step_kernel(thresh_ref, state_ref, fired_ref, conn_ref, clock_ref,
                      new_state_ref, new_fired_ref):
    new_state, new_fired = _linear_step(state_ref[...], fired_ref[...],
                                        conn_ref[...], clock_ref[...],
                                        thresh_ref[0])
    new_state_ref[...] = new_state
    new_fired_ref[...] = new_fired


def _worm_rollout_kernel(num_steps, unroll, thresh_ref, state_ref, fired_ref,
                         conn_ref, clock_ref, new_state_ref, new_fired_ref):
    thresh = thresh_ref[0]
    conn_t = conn_ref[...]
    # Hoist the (1, Np) -> (tile_b, Np) clock broadcast out of the loop; JAX
    # does not CSE broadcast_in_dim, it would otherwise be re-emitted T times.
    clock = jnp.broadcast_to(clock_ref[...], state_ref.shape)

    def body(_, carry):
        state, fired = carry
        return _linear_step(state, fired, conn_t, clock, thresh)

    state, fired = lax.fori_loop(0, num_steps, body,
                                 (state_ref[...], fired_ref[...]),
                                 unroll=unroll)
    new_state_ref[...] = state
    new_fired_ref[...] = fired


# -------------------------------- wrappers ---------------------------------


def worm_step(state, fired, connectome=None, clock_neuron=None, thresh=0.0, *,
              params=None, tile_b=None, tile_n=None,
              weights_dtype=jnp.float32):
    """One DiscreteWormNet sim_step. Returns (new_state, new_fired)."""
    B, N = state.shape
    if params is None:
        params = precondition_params(connectome, clock_neuron,
                                     weights_dtype=weights_dtype)
    assert params.n == N
    Np = params.conn_t.shape[0]
    Bp = _round_up(B, 8)

    if tile_b is None:
        tile_b = _default_tile_b(Bp, _num_tensorcores())
    if tile_n is None:
        tile_n = Np
    assert tile_b % 8 == 0 and Bp % tile_b == 0
    assert tile_n % 128 == 0 and Np % tile_n == 0

    state_p = _pad2(state.astype(jnp.float32), Bp, Np)
    fired_p = _pad2(fired.astype(jnp.float32), Bp, Np)
    thresh_arr = jnp.full((1,), thresh, dtype=jnp.float32)

    n_b, n_n = Bp // tile_b, Np // tile_n
    # Outer axis = output-neuron tiles, inner axis = batch tiles: the weight
    # block index varies only on the slow axis, so Pallas skips the connectome
    # DMA across all inner (batch) iterations -> weight streams from HBM once.
    grid = (n_n, n_b)

    smem_spec = pl.BlockSpec(memory_space=pltpu.MemorySpace.SMEM)
    bs_out = pl.BlockSpec((tile_b, tile_n), lambda j, i: (i, j))
    bs_state = bs_out
    bs_fired = pl.BlockSpec((tile_b, Np), lambda j, i: (i, 0))
    if n_n == 1:
        # Constant weight block index: single-buffer it (halves weight VMEM).
        bs_conn = pl.BlockSpec((Np, tile_n), lambda j, i: (0, j),
                               pipeline_mode=pl.Buffered(1))
        conn_bufs = 1
    else:
        bs_conn = pl.BlockSpec((Np, tile_n), lambda j, i: (0, j))
        conn_bufs = 2
    bs_clock = pl.BlockSpec((1, tile_n), lambda j, i: (0, j))

    w_item = jnp.dtype(params.conn_t.dtype).itemsize
    vmem_needed = (conn_bufs * Np * tile_n * w_item
                   + 2 * tile_n * 4                      # clock
                   + 2 * tile_b * tile_n * 4             # state input
                   + 2 * tile_b * Np * 4                 # fired input
                   + 2 * 2 * tile_b * tile_n * 4)        # two outputs
    vmem_limit = _vmem_limit_bytes(vmem_needed)

    new_state, new_fired = pl.pallas_call(
        _worm_step_kernel,
        out_shape=(jax.ShapeDtypeStruct((Bp, Np), jnp.float32),
                   jax.ShapeDtypeStruct((Bp, Np), jnp.float32)),
        grid_spec=pltpu.PrefetchScalarGridSpec(
            num_scalar_prefetch=0,
            grid=grid,
            in_specs=[smem_spec, bs_state, bs_fired, bs_conn, bs_clock],
            out_specs=[bs_out, bs_out],
        ),
        compiler_params=pltpu.CompilerParams(
            dimension_semantics=("parallel", "parallel"),
            vmem_limit_bytes=vmem_limit),
    )(thresh_arr, state_p, fired_p, params.conn_t, params.clock)

    if (Bp, Np) != (B, N):
        new_state = new_state[:B, :N]
        new_fired = new_fired[:B, :N]
    return new_state, new_fired


def worm_rollout(state, fired, connectome=None, clock_neuron=None, thresh=0.0,
                 *, num_steps=1, params=None, tile_b=None,
                 weights_dtype=jnp.float32):
    """`num_steps` fused sim_steps in a single pallas_call.

    state/fired stay on-core across steps; the connectome is loaded into VMEM
    once per batch tile. Returns the final (state, fired).
    """
    B, N = state.shape
    if params is None:
        params = precondition_params(connectome, clock_neuron,
                                     weights_dtype=weights_dtype)
    assert params.n == N
    Np = params.conn_t.shape[0]
    Bp = _round_up(B, 8)

    if tile_b is None:
        tile_b = _default_tile_b(Bp, _num_tensorcores())
    assert tile_b % 8 == 0 and Bp % tile_b == 0

    state_p = _pad2(state.astype(jnp.float32), Bp, Np)
    fired_p = _pad2(fired.astype(jnp.float32), Bp, Np)
    thresh_arr = jnp.full((1,), thresh, dtype=jnp.float32)

    n_b = Bp // tile_b
    grid = (n_b,)

    smem_spec = pl.BlockSpec(memory_space=pltpu.MemorySpace.SMEM)
    bs_conn = pl.BlockSpec((Np, Np), lambda i: (0, 0),
                           pipeline_mode=pl.Buffered(1))
    bs_clock = pl.BlockSpec((1, Np), lambda i: (0, 0),
                            pipeline_mode=pl.Buffered(1))
    if n_b == 1:
        # Per-core grid of one iteration: double-buffering the carried
        # state/fired inputs is dead VMEM (matters on v7x's 64 MiB per TC).
        bs_bn_in = pl.BlockSpec((tile_b, Np), lambda i: (i, 0),
                                pipeline_mode=pl.Buffered(1))
        in_bufs = 1
    else:
        bs_bn_in = pl.BlockSpec((tile_b, Np), lambda i: (i, 0))
        in_bufs = 2
    bs_bn_out = pl.BlockSpec((tile_b, Np), lambda i: (i, 0))

    w_item = jnp.dtype(params.conn_t.dtype).itemsize
    vmem_needed = (Np * Np * w_item + Np * 4
                   + in_bufs * 2 * tile_b * Np * 4       # state + fired inputs
                   + 2 * 2 * tile_b * Np * 4)            # two outputs
    cap = _vmem_capacity_bytes()
    if vmem_needed > int(0.85 * cap):
        raise ValueError(
            f"resident connectome + buffers ({vmem_needed / 2**20:.1f} MiB) do not "
            f"fit this chip's VMEM ({cap / 2**20:.0f} MiB); use "
            f"weights_dtype=jnp.bfloat16 or fall back to repeated worm_step().")
    vmem_limit = _vmem_limit_bytes(vmem_needed)

    unroll = _pick_unroll(int(num_steps), tile_b, Np)
    kernel = functools.partial(_worm_rollout_kernel, int(num_steps), unroll)
    new_state, new_fired = pl.pallas_call(
        kernel,
        out_shape=(jax.ShapeDtypeStruct((Bp, Np), jnp.float32),
                   jax.ShapeDtypeStruct((Bp, Np), jnp.float32)),
        grid_spec=pltpu.PrefetchScalarGridSpec(
            num_scalar_prefetch=0,
            grid=grid,
            in_specs=[smem_spec, bs_bn_in, bs_bn_in, bs_conn, bs_clock],
            out_specs=[bs_bn_out, bs_bn_out],
        ),
        compiler_params=pltpu.CompilerParams(
            dimension_semantics=("parallel",),
            vmem_limit_bytes=vmem_limit),
    )(thresh_arr, state_p, fired_p, params.conn_t, params.clock)

    if (Bp, Np) != (B, N):
        new_state = new_state[:B, :N]
        new_fired = new_fired[:B, :N]
    return new_state, new_fired


def worm_step_ref(state, fired, connectome, clock_neuron, thresh=0.0):
    """Pure-JAX reference matching the PyTorch module."""
    s = state + fired @ connectome.T + clock_neuron
    f = jnp.where(s - thresh >= 0.0, 1.0, 0.0).astype(jnp.float32)
    return s * (1.0 - f), f


if __name__ == "__main__":
    nneuron = 128
    batch = 8
    thresh = 0.0

    key = jax.random.PRNGKey(0)
    k_conn, k_clock, k_state, k_fired = jax.random.split(key, 4)

    # Deterministic "parameters" (torch.normal(0, 1, ...) analogue).
    connectome = jax.random.normal(k_conn, (nneuron, nneuron), jnp.float32)
    clock_neuron = jax.random.normal(k_clock, (nneuron,), jnp.float32)

    # Example inputs.
    state = jax.random.normal(k_state, (batch, nneuron), jnp.float32)
    fired = (jax.random.uniform(k_fired, (batch, nneuron)) > 0.5
             ).astype(jnp.float32)

    # Precondition (pad / transpose / cast) the parameters ONCE, outside the
    # per-step call path.
    params = precondition_params(connectome, clock_neuron)

    # Single forward step (== DiscreteWormNet.forward).
    new_state, new_fired = worm_step(state, fired, thresh=thresh, params=params)
    jax.block_until_ready((new_state, new_fired))
    ref_state, ref_fired = worm_step_ref(state, fired, connectome,
                                         clock_neuron, thresh)
    assert new_state.shape == (batch, nneuron)
    assert new_fired.shape == (batch, nneuron)
    assert jnp.allclose(new_state, ref_state, atol=1e-4, rtol=1e-4)
    assert jnp.array_equal(new_fired, ref_fired)

    # Fused multi-step rollout (the big perf lever: one launch, weight resident
    # in VMEM across all T steps).
    T = 4
    roll_state, roll_fired = worm_rollout(state, fired, thresh=thresh,
                                          params=params, num_steps=T)
    jax.block_until_ready((roll_state, roll_fired))
    ref_s, ref_f = state, fired
    for _ in range(T):
        ref_s, ref_f = worm_step_ref(ref_s, ref_f, connectome, clock_neuron,
                                     thresh)
    assert jnp.allclose(roll_state, ref_s, atol=1e-3, rtol=1e-3)
    assert jnp.array_equal(roll_fired, ref_f)

    # Opt-in bf16 weight path (MXU-fast, halves resident-weight VMEM). It can
    # flip borderline threshold decisions, so validate loosely, not bit-exact.
    params_bf16 = precondition_params(connectome, clock_neuron,
                                      weights_dtype=jnp.bfloat16)
    bf_state, bf_fired = worm_step(state, fired, thresh=thresh,
                                   params=params_bf16)
    jax.block_until_ready((bf_state, bf_fired))
    assert bool(jnp.all(jnp.isfinite(bf_state)))
    assert float(jnp.mean(jnp.abs(bf_fired - ref_fired))) < 0.05

    print("KERNEL_OK")
</pallas_src>

<mosaic_0001>
module attributes {stable_mosaic.version = 11 : i64} {
  func.func @_worm_step_kernel(%arg0: i32, %arg1: i32, %arg2: memref<1xf32, #tpu.memory_space<smem>>, %arg3: memref<8x128xf32, #tpu.memory_space<vmem>>, %arg4: memref<8x128xf32, #tpu.memory_space<vmem>>, %arg5: memref<128x128xf32, #tpu.memory_space<vmem>>, %arg6: memref<1x128xf32, #tpu.memory_space<vmem>>, %arg7: memref<8x128xf32, #tpu.memory_space<vmem>>, %arg8: memref<8x128xf32, #tpu.memory_space<vmem>>) attributes {dimension_semantics = [#tpu.dimension_semantics<parallel>, #tpu.dimension_semantics<parallel>], iteration_bounds = array<i64: 1, 1>, scalar_prefetch = 0 : i64, scratch_operands = 0 : i64, tpu.core_type = #tpu.core_type<tc>, window_params = [{transform_indices = @transform_0, window_bounds = array<i64: 1>}, {transform_indices = @transform_1, window_bounds = array<i64: 8, 128>}, {transform_indices = @transform_2, window_bounds = array<i64: 8, 128>}, {pipeline_mode = #tpu.pipeline_mode<synchronous>, transform_indices = @transform_3, window_bounds = array<i64: 128, 128>}, {transform_indices = @transform_4, window_bounds = array<i64: 1, 128>}, {transform_indices = @transform_5, window_bounds = array<i64: 8, 128>}, {transform_indices = @transform_6, window_bounds = array<i64: 8, 128>}]} {
    %c0 = arith.constant 0 : index
    %c0_0 = arith.constant 0 : index
    %0 = vector.load %arg3[%c0, %c0_0] : memref<8x128xf32, #tpu.memory_space<vmem>>, vector<8x128xf32>
    %c0_1 = arith.constant 0 : index
    %c0_2 = arith.constant 0 : index
    %1 = vector.load %arg4[%c0_1, %c0_2] : memref<8x128xf32, #tpu.memory_space<vmem>>, vector<8x128xf32>
    %c0_3 = arith.constant 0 : index
    %c0_4 = arith.constant 0 : index
    %2 = vector.load %arg5[%c0_3, %c0_4] : memref<128x128xf32, #tpu.memory_space<vmem>>, vector<128x128xf32>
    %c0_5 = arith.constant 0 : index
    %c0_6 = arith.constant 0 : index
    %3 = vector.load %arg6[%c0_5, %c0_6] : memref<1x128xf32, #tpu.memory_space<vmem>>, vector<1x128xf32>
    %c0_7 = arith.constant 0 : index
    %4 = memref.load %arg2[%c0_7] : memref<1xf32, #tpu.memory_space<smem>>
    %cst = arith.constant dense<0.000000e+00> : vector<8x128xf32>
    %5 = tpu.matmul %1, %2, %cst {dimension_numbers = #tpu.dot_dimension_numbers<[1], [0], [0], [1], [0, 0, 1, 1], [], []>} : vector<8x128xf32>, vector<128x128xf32>, vector<8x128xf32> -> vector<8x128xf32>
    %6 = arith.addf %0, %5 : vector<8x128xf32>
    %7 = vector.broadcast %3 : vector<1x128xf32> to vector<8x128xf32>
    %8 = arith.addf %6, %7 : vector<8x128xf32>
    %9 = vector.broadcast %4 : f32 to vector<8x128xf32>
    %10 = arith.cmpf oge, %8, %9 : vector<8x128xf32>
    %11 = arith.extui %10 : vector<8x128xi1> to vector<8x128xi32>
    %12 = arith.sitofp %11 : vector<8x128xi32> to vector<8x128xf32>
    %cst_8 = arith.constant 1.000000e+00 : f32
    %13 = vector.broadcast %cst_8 : f32 to vector<8x128xf32>
    %14 = arith.subf %13, %12 : vector<8x128xf32>
    %15 = arith.mulf %8, %14 : vector<8x128xf32>
    %c0_9 = arith.constant 0 : index
    %c0_10 = arith.constant 0 : index
    %16 = vector.load %arg7[%c0_9, %c0_10] : memref<8x128xf32, #tpu.memory_space<vmem>>, vector<8x128xf32>
    tpu.vector_store %arg7[%c0_9, %c0_10], %15 {strides = array<i32>} : memref<8x128xf32, #tpu.memory_space<vmem>>, vector<8x128xf32>,
    %c0_11 = arith.constant 0 : index
    %c0_12 = arith.constant 0 : index
    %17 = vector.load %arg8[%c0_11, %c0_12] : memref<8x128xf32, #tpu.memory_space<vmem>>, vector<8x128xf32>
    tpu.vector_store %arg8[%c0_11, %c0_12], %12 {strides = array<i32>} : memref<8x128xf32, #tpu.memory_space<vmem>>, vector<8x128xf32>,
    return
  }
  func.func @transform_0(%arg0: i32, %arg1: i32) -> i32 {
    %c0_i32 = arith.constant 0 : i32
    %c0_i32_0 = arith.constant 0 : i32
    return %c0_i32 : i32
  }
  func.func @transform_1(%arg0: i32, %arg1: i32) -> (i32, i32) {
    %c0_i32 = arith.constant 0 : i32
    return %arg1, %arg0 : i32, i32
  }
  func.func @transform_2(%arg0: i32, %arg1: i32) -> (i32, i32) {
    %c0_i32 = arith.constant 0 : i32
    %c0_i32_0 = arith.constant 0 : i32
    return %arg1, %c0_i32 : i32, i32
  }
  func.func @transform_3(%arg0: i32, %arg1: i32) -> (i32, i32) {
    %c0_i32 = arith.constant 0 : i32
    %c0_i32_0 = arith.constant 0 : i32
    return %c0_i32, %arg0 : i32, i32
  }
  func.func @transform_4(%arg0: i32, %arg1: i32) -> (i32, i32) {
    %c0_i32 = arith.constant 0 : i32
    %c0_i32_0 = arith.constant 0 : i32
    return %c0_i32, %arg0 : i32, i32
  }
  func.func @transform_5(%arg0: i32, %arg1: i32) -> (i32, i32) {
    %c0_i32 = arith.constant 0 : i32
    return %arg1, %arg0 : i32, i32
  }
  func.func @transform_6(%arg0: i32, %arg1: i32) -> (i32, i32) {
    %c0_i32 = arith.constant 0 : i32
    return %arg1, %arg0 : i32, i32
  }
}

</mosaic_0001>

<llo_original>
// kernel: tpu_custom_call.1
$region0: #{tpu_custom_call.1}
  #allocation0 [shape = 'u32[]', space=smem, size = 0x4, offset = 0x4, fixed_abs, tag = 'smem constant byte address 0x4 - core index']
  #allocation1 [shape = 'u32[72,128]{1,0:T(1,128)}', space=vmem, size = 0x9000, scoped, tag = 'internal scratch']
  #allocation2 [shape = 'f32[1]{0:T(128)S(6)}', space=smem, size = 0x200, scoped, tag = 'scoped memory for tpu_custom_call.1']
  %s0 = inlined_call_operand.<no memory space> [shape: f32[1], index: 0, kind: input, shape index: {}]
  %s1 = inlined_call_operand.hbm [shape: f32[8,128], index: 1, kind: input, shape index: {}]
  %s2 = inlined_call_operand.hbm [shape: f32[8,128], index: 2, kind: input, shape index: {}]
  %s3 = inlined_call_operand.hbm [shape: f32[128,128], index: 3, kind: input, shape index: {}]
  %s4 = inlined_call_operand.vmem [shape: f32[1,128], index: 4, kind: input, shape index: {}]
  %s5 = inlined_call_operand.hbm [shape: f32[8,128], index: 5, kind: output, shape index: {0}]
  %s6 = inlined_call_operand.hbm [shape: f32[8,128], index: 6, kind: output, shape index: {1}]
  %7 = xla_tuple %s5, %s6
  %s8 = sld [smem:[#allocation0]]
  $region50: #{tpu_custom_call.1} parent=0
    _
  %s10 = ssub.s32 1, %s8
  %s11 = scalar_select 0, %s10, %s8
  %12 = sst [smem:[#allocation2]] %s0
  $region1: #{tpu_custom_call.1} parent=0
    #allocation3 [shape = 'u8[4096]{0}', space=vmem, size = 0x1000, scoped, tag = 'input window, operand 1, single buffered']
    #allocation4 [shape = 's32[1]{0}', space=sflag, size = 0x4, scoped, tag = 'scoped memory for tpu_custom_call.1']
    #allocation5 [shape = 's32[1]{0}', space=sflag, size = 0x4, scoped, tag = 'scoped memory for tpu_custom_call.1']
    #allocation6 [shape = 'u8[4096]{0}', space=vmem, size = 0x1000, scoped, tag = 'input window, operand 2, single buffered']
    #allocation7 [shape = 's32[1]{0}', space=sflag, size = 0x4, scoped, tag = 'scoped memory for tpu_custom_call.1']
    #allocation8 [shape = 'u8[65536]{0}', space=vmem, size = 0x10000, scoped, tag = 'input window, operand 3, single buffered']
    #allocation9 [shape = 'u8[4096]{0}', space=vmem, size = 0x1000, scoped, tag = 'output window, operand 0, single buffered']
    #allocation10 [shape = 'u8[4096]{0}', space=vmem, size = 0x1000, scoped, tag = 'output window, operand 1, single buffered']
    #allocation11 [shape = 's32[1]{0}', space=sflag, size = 0x4, scoped, tag = 'scoped memory for tpu_custom_call.1']
    %13 = vsyncpa [#allocation4], 0
    %14 = vsyncpa [#allocation7], 0
    %15 = vsyncpa [#allocation5], 0
    %16 = vsyncpa [#allocation11], 0
    // Predicated region
    $region2: #{tpu_custom_call.1} parent=1 // pred_check
      _
    $region3: #{tpu_custom_call.1} parent=1 // pred_check_branch
      %18 = sbr.rel (0) target = $region5
    $region4: #{tpu_custom_call.1} parent=1 // pred_region
      _
    $region5: #{tpu_custom_call.1} parent=1 // pred_fallthru
      _
    // Predicated region
    $region6: #{tpu_custom_call.1} parent=1 // pred_check
      _
    $region7: #{tpu_custom_call.1} parent=1 // pred_check_branch
      %20 = sbr.rel (0) target = $region9
    $region8: #{tpu_custom_call.1} parent=1 // pred_region
      %22 = vsyncadd [#allocation4], 0
      %s24 = sshll.u32 %s1, 4
      %s25 = int_to_ptr.hbm [resolvable:$true] %s24
      %s26 = sshll.u32 [#allocation3], 4
      %s27 = int_to_ptr.vmem [resolvable:$true] %s26
      %29 = dma.hbm_to_vmem [thread:$0]  %s25, 128, %s27, [#allocation4]
    $region9: #{tpu_custom_call.1} parent=1 // pred_fallthru
      _
    // Predicated region
    $region10: #{tpu_custom_call.1} parent=1 // pred_check
      _
    $region11: #{tpu_custom_call.1} parent=1 // pred_check_branch
      %31 = sbr.rel (0) target = $region13
    $region12: #{tpu_custom_call.1} parent=1 // pred_region
      %33 = vsyncadd [#allocation7], 0
      %s35 = sshll.u32 %s2, 4
      %s36 = int_to_ptr.hbm [resolvable:$true] %s35
      %s37 = sshll.u32 [#allocation6], 4
      %s38 = int_to_ptr.vmem [resolvable:$true] %s37
      %40 = dma.hbm_to_vmem [thread:$0]  %s36, 128, %s38, [#allocation7]
    $region13: #{tpu_custom_call.1} parent=1 // pred_fallthru
      _
    // Predicated region
    $region14: #{tpu_custom_call.1} parent=1 // pred_check
      _
    $region15: #{tpu_custom_call.1} parent=1 // pred_check_branch
      %42 = sbr.rel (0) target = $region17
    $region16: #{tpu_custom_call.1} parent=1 // pred_region
      %44 = vsyncadd [#allocation7], 0
      %s45 = sshll.u32 %s3, 4
      %s46 = int_to_ptr.hbm [resolvable:$true] %s45
      %s47 = sshll.u32 [#allocation8], 4
      %s48 = int_to_ptr.vmem [resolvable:$true] %s47
      %53 = dma.hbm_to_vmem [thread:$0]  %s46, 2048, %s48, [#allocation7], 128, 128, 8
    $region17: #{tpu_custom_call.1} parent=1 // pred_fallthru
      _
    // Predicated region
    $region18: #{tpu_custom_call.1} parent=1 // pred_check
      _
    $region19: #{tpu_custom_call.1} parent=1 // pred_check_branch
      %55 = sbr.rel (0) target = $region21
    $region20: #{tpu_custom_call.1} parent=1 // pred_region
      _
    $region21: #{tpu_custom_call.1} parent=1 // pred_fallthru
      _
    // Predicated region
    $region22: #{tpu_custom_call.1} parent=1 // pred_check
      _
    $region23: #{tpu_custom_call.1} parent=1 // pred_check_branch
      %57 = sbr.rel (0) target = $region25
    $region24: #{tpu_custom_call.1} parent=1 // pred_region
      %59 = dma.done [#allocation4], 128
    $region25: #{tpu_custom_call.1} parent=1 // pred_fallthru
      _
    // Predicated region
    $region26: #{tpu_custom_call.1} parent=1 // pred_check
      _
    $region27: #{tpu_custom_call.1} parent=1 // pred_check_branch
      %61 = sbr.rel (0) target = $region29
    $region28: #{tpu_custom_call.1} parent=1 // pred_region
      %63 = dma.done [#allocation7], 128
    $region29: #{tpu_custom_call.1} parent=1 // pred_fallthru
      _
    // Predicated region
    $region30: #{tpu_custom_call.1} parent=1 // pred_check
      _
    $region31: #{tpu_custom_call.1} parent=1 // pred_check_branch
      %65 = sbr.rel (0) target = $region33
    $region32: #{tpu_custom_call.1} parent=1 // pred_region
      %67 = dma.done [#allocation7], 2048
    $region33: #{tpu_custom_call.1} parent=1 // pred_fallthru
      _
    %v68 = vld [vmem:[#allocation3] sm:$0xff]
    %v69 = vld [vmem:[#allocation6] sm:$0xff]
    %v70 = vld [vmem:[#allocation8] sm:$0xff]
    %v71 = vld [vmem:[#allocation8 + $0x8] sm:$0xff]
    %v72 = vld [vmem:[#allocation8 + $0x10] sm:$0xff]
    %v73 = vld [vmem:[#allocation8 + $0x18] sm:$0xff]
    %v74 = vld [vmem:[#allocation8 + $0x20] sm:$0xff]
    %v75 = vld [vmem:[#allocation8 + $0x28] sm:$0xff]
    %v76 = vld [vmem:[#allocation8 + $0x30] sm:$0xff]
    %v77 = vld [vmem:[#allocation8 + $0x38] sm:$0xff]
    %v78 = vld [vmem:[#allocation8 + $0x40] sm:$0xff]
    %v79 = vld [vmem:[#allocation8 + $0x48] sm:$0xff]
    %v80 = vld [vmem:[#allocation8 + $0x50] sm:$0xff]
    %v81 = vld [vmem:[#allocation8 + $0x58] sm:$0xff]
    %v82 = vld [vmem:[#allocation8 + $0x60] sm:$0xff]
    %v83 = vld [vmem:[#allocation8 + $0x68] sm:$0xff]
    %v84 = vld [vmem:[#allocation8 + $0x70] sm:$0xff]
    %v85 = vld [vmem:[#allocation8 + $0x78] sm:$0xff]
    %v86 = vld [vmem:[%s4] sm:$0x1]
    %s87 = sld [smem:[#allocation2]]
    %88 = vmatpush.msra.mxu0 %v85
    %89 = vmatpush.msra.mxu0 %v84
    %90 = vmatpush.msra.mxu0 %v83
    %91 = vmatpush.msra.mxu0 %v82
    %92 = vmatpush.msra.mxu0 %v81
    %93 = vmatpush.msra.mxu0 %v80
    %94 = vmatpush.msra.mxu0 %v79
    %95 = vmatpush.msra.mxu0 %v78
    %96 = vmatpush.msra.mxu0 %v77
    %97 = vmatpush.msra.mxu0 %v76
    %98 = vmatpush.msra.mxu0 %v75
    %99 = vmatpush.msra.mxu0 %v74
    %100 = vmatpush.msra.mxu0 %v73
    %101 = vmatpush.msra.mxu0 %v72
    %102 = vmatpush.msra.mxu0 %v71
    %103 = vmatpush.msra.mxu0 %v70
    %104 = vmatmul.f32.gmra.mxu0 %v69
    %v105 = vpop.f32.mrf.mxu0
    %v106 = vadd.f32 0.0, %v105
    %107 = vdwg.mxu0
    %v108 = vadd.f32 %v68, %v106
    %v110 = vperm.slane %v86, 0
    %v112 = vadd.f32 %v108, %v110
    %v113 = vstv %s87
    %vm114 = vcmp.ge.f32.partialorder %v112, %v113
    %v115 = vsel %vm114, 1, 0
    %v116 = vcvt.s32.f32 %v115
    %v117 = vsub.f32 1.0, %v116
    %v118 = vmul.f32 %v112, %v117
    %119 = vst [vmem:[#allocation9] sm:$0xff] %v118
    %120 = vst [vmem:[#allocation10] sm:$0xff] %v116
    // Predicated region
    $region34: #{tpu_custom_call.1} parent=1 // pred_check
      _
    $region35: #{tpu_custom_call.1} parent=1 // pred_check_branch
      %122 = sbr.rel (0) target = $region37
    $region36: #{tpu_custom_call.1} parent=1 // pred_region
      %124 = vsyncadd [#allocation5], 0
      %s126 = sshll.u32 [#allocation9], 4
      %s127 = int_to_ptr.vmem [resolvable:$true] %s126
      %s128 = sshll.u32 %s5, 4
      %s129 = int_to_ptr.hbm [resolvable:$true] %s128
      %131 = dma.vmem_to_hbm [thread:$0]  %s127, 128, %s129, [#allocation5]
    $region37: #{tpu_custom_call.1} parent=1 // pred_fallthru
      _
    // Predicated region
    $region38: #{tpu_custom_call.1} parent=1 // pred_check
      _
    $region39: #{tpu_custom_call.1} parent=1 // pred_check_branch
      %133 = sbr.rel (0) target = $region41
    $region40: #{tpu_custom_call.1} parent=1 // pred_region
      %135 = vsyncadd [#allocation11], 0
      %s137 = sshll.u32 [#allocation10], 4
      %s138 = int_to_ptr.vmem [resolvable:$true] %s137
      %s139 = sshll.u32 %s6, 4
      %s140 = int_to_ptr.hbm [resolvable:$true] %s139
      %142 = dma.vmem_to_hbm [thread:$0]  %s138, 128, %s140, [#allocation11]
    $region41: #{tpu_custom_call.1} parent=1 // pred_fallthru
      _
    // Predicated region
    $region42: #{tpu_custom_call.1} parent=1 // pred_check
      _
    $region43: #{tpu_custom_call.1} parent=1 // pred_check_branch
      %144 = sbr.rel (0) target = $region45
    $region44: #{tpu_custom_call.1} parent=1 // pred_region
      %146 = dma.done [#allocation5], 128
    $region45: #{tpu_custom_call.1} parent=1 // pred_fallthru
      _
    // Predicated region
    $region46: #{tpu_custom_call.1} parent=1 // pred_check
      _
    $region47: #{tpu_custom_call.1} parent=1 // pred_check_branch
      %148 = sbr.rel (0) target = $region49
    $region48: #{tpu_custom_call.1} parent=1 // pred_region
      %150 = dma.done [#allocation11], 128
    $region49: #{tpu_custom_call.1} parent=1 // pred_fallthru
      _
    %151 = vsyncpa [#allocation4], 1
    %152 = vsyncpa [#allocation7], 1
    %153 = vsyncpa [#allocation5], 1
    %154 = vsyncpa [#allocation11], 1

</llo_original>
